<compile_context>
chip_gen: v7x
topology: tpu7x:2x2x1
jax: 0.10.0
libtpu: 0.0.40
codegen_flags: <defaults>
</compile_context>

<pallas_src>
import functools

import jax
import jax.numpy as jnp
from jax.experimental import pallas as pl
from jax.experimental.pallas import tpu as pltpu

# Full-model dimensions (not exercised in the quick smoke test below).
IN_FEATURES = 25088   # 512 * 7 * 7
OUT_FEATURES = 10572

_LANE = 128
_TK_TARGET = 3584     # 25088 = 7 * 3584, and 3584 = 28 * 128
_TN_TARGET = 512


def _round_up(x, m):
    return ((x + m - 1) // m) * m


def _pick_tile(dim, target):
    """Largest 128-multiple tile <= target (or dim rounded up to 128 if small)."""
    if dim <= target:
        return _round_up(dim, _LANE)
    return (target // _LANE) * _LANE


def _linear_kernel(x_ref, w_ref, b_ref, o_ref, acc_ref, *, tk):
    """One (n, k) grid step of  out = x @ W + b  with f32 accumulation.

    x_ref : (Mp, Kp) bf16, resident in VMEM (constant index_map)
    w_ref : (tk, tn) bf16 streamed weight tile (the HBM long pole)
    b_ref : (1, tn)  f32 bias tile
    o_ref : (Mp, tn) f32 output tile
    acc_ref: (Mp, tn) f32 scratch accumulator
    """
    k = pl.program_id(1)

    @pl.when(k == 0)
    def _():
        acc_ref[...] = jnp.zeros_like(acc_ref)

    k_start = pl.multiple_of(k * tk, tk)      # tk is always a multiple of 128
    x_chunk = x_ref[:, pl.ds(k_start, tk)]
    acc_ref[...] += jnp.dot(x_chunk, w_ref[...],
                            preferred_element_type=jnp.float32)

    @pl.when(k == pl.num_programs(1) - 1)
    def _():
        o_ref[...] = (acc_ref[...] + b_ref[...]).astype(o_ref.dtype)


def prepare_linear_params(w_kn, bias_n, *, tk=None, tn=None):
    """One-time (hoisted) weight prep: pad to tile multiples and cast W to bf16.

    w_kn:   [K, N] float32  (torch Linear weight, stored transposed: [in, out])
    bias_n: [N]    float32
    Returns (w_padded bf16 [Kp, Np], bias_padded f32 [1, Np], (tk, tn)).
    """
    K, N = w_kn.shape
    tk = _pick_tile(K, _TK_TARGET) if tk is None else tk
    tn = _pick_tile(N, _TN_TARGET) if tn is None else tn
    Kp, Np = _round_up(K, tk), _round_up(N, tn)
    w_p = jnp.zeros((Kp, Np), jnp.bfloat16).at[:K, :N].set(
        w_kn.astype(jnp.bfloat16))
    b_p = jnp.zeros((1, Np), jnp.float32).at[0, :N].set(
        bias_n.astype(jnp.float32))
    return w_p, b_p, (tk, tn)


@functools.partial(jax.jit, static_argnames=("tk", "tn", "out_features"))
def my_layers_pallas(features_nchw, w_padded, b_padded, *, tk, tn, out_features):
    """Dropout(eval, identity) -> Flatten -> Linear, GEMM in a Pallas kernel.

    features_nchw: [B, C, H, W] backbone output (C*H*W = K)
    w_padded:      [Kp, Np] bf16 pre-padded / pre-cast weight ([in, out] layout)
    b_padded:      [1, Np] f32 pre-padded bias
    returns:       [B, out_features] float32
    """
    B = features_nchw.shape[0]
    K = features_nchw.shape[1] * features_nchw.shape[2] * features_nchw.shape[3]
    Kp, Np = w_padded.shape
    N = out_features

    # Dropout(0.2) eval mode == identity; Flatten of an NCHW tensor row-major
    # matches torch.nn.Flatten exactly.  (plain-JAX glue)
    x = features_nchw.reshape(B, K)

    # Pad the (tiny) activation: M -> multiple of 8, K -> Kp; cast to bf16.
    Mp = max(8, _round_up(B, 8))
    x_p = jnp.zeros((Mp, Kp), jnp.bfloat16).at[:B, :K].set(
        x.astype(jnp.bfloat16))

    grid = (Np // tn, Kp // tk)   # N axis first (parallel), K axis = reduction

    cost = pl.CostEstimate(
        flops=2 * Mp * Kp * Np,
        transcendentals=0,
        bytes_accessed=(w_padded.size * 2 + x_p.size * 2
                        + Mp * Np * 4 + b_padded.size * 4),
    )

    out_p = pl.pallas_call(
        functools.partial(_linear_kernel, tk=tk),
        out_shape=jax.ShapeDtypeStruct((Mp, Np), jnp.float32),
        grid_spec=pltpu.PrefetchScalarGridSpec(
            num_scalar_prefetch=0,
            grid=grid,
            in_specs=[
                # Whole activation resident in VMEM: constant index_map means
                # it is DMA'd once, not re-streamed per N block.
                pl.BlockSpec((Mp, Kp), lambda n, k: (0, 0)),
                # Streamed bf16 weight tile.
                pl.BlockSpec((tk, tn), lambda n, k: (k, n)),
                # Bias tile.
                pl.BlockSpec((1, tn), lambda n, k: (0, n)),
            ],
            out_specs=pl.BlockSpec((Mp, tn), lambda n, k: (0, n)),
            scratch_shapes=[pltpu.VMEM((Mp, tn), jnp.float32)],
        ),
        compiler_params=pltpu.CompilerParams(
            dimension_semantics=("parallel", "arbitrary"),
            vmem_limit_bytes=32 * 1024 * 1024,
        ),
        cost_estimate=cost,
    )(x_p, w_padded, b_padded)

    return out_p[:B, :N]


def init_params(key, in_features, out_features):
    """Deterministic nn.Linear-style init: U(-1/sqrt(fan_in), 1/sqrt(fan_in)).

    Stored as [in, out] (transposed relative to torch's [out, in])."""
    kw, kb = jax.random.split(key)
    bound = 1.0 / (in_features ** 0.5)
    w = jax.random.uniform(kw, (in_features, out_features), jnp.float32,
                           minval=-bound, maxval=bound)
    b = jax.random.uniform(kb, (out_features,), jnp.float32,
                           minval=-bound, maxval=bound)
    return w, b


if __name__ == "__main__":
    key = jax.random.PRNGKey(0)
    k_feat, k_param = jax.random.split(key)

    # Small smoke-test shapes (same structure/code path as the real model,
    # which uses features [B, 512, 7, 7] -> Linear(25088, 10572)).
    B, C, H, W = 2, 16, 8, 8            # K = C*H*W = 1024
    out_features = 384

    features = jax.random.normal(k_feat, (B, C, H, W), jnp.float32)
    w, b = init_params(k_param, C * H * W, out_features)

    # One-time (hoisted) weight prep: pad + cast to bf16.
    w_p, b_p, (tk, tn) = prepare_linear_params(w, b)

    out = my_layers_pallas(features, w_p, b_p, tk=tk, tn=tn,
                           out_features=out_features)
    out = jax.block_until_ready(out)
    assert out.shape == (B, out_features), out.shape

    # Plain-JAX reference (bf16 inputs, f32 accumulation, same as the kernel).
    x_ref = features.reshape(B, -1).astype(jnp.bfloat16).astype(jnp.float32)
    w_ref = w.astype(jnp.bfloat16).astype(jnp.float32)
    ref = x_ref @ w_ref + b
    err = float(jnp.max(jnp.abs(out - ref)))
    assert jnp.allclose(out, ref, atol=2e-2, rtol=2e-2), err

    print("KERNEL_OK")
</pallas_src>

<mosaic_0001>
module attributes {stable_mosaic.version = 11 : i64} {
  func.func @_linear_kernel(%arg0: i32, %arg1: i32, %arg2: memref<8x1024xbf16, #tpu.memory_space<vmem>>, %arg3: memref<1024x384xbf16, #tpu.memory_space<vmem>>, %arg4: memref<1x384xf32, #tpu.memory_space<vmem>>, %arg5: memref<8x384xf32, #tpu.memory_space<vmem>>, %arg6: memref<8x384xf32, #tpu.memory_space<vmem>>) attributes {dimension_semantics = [#tpu.dimension_semantics<parallel>, #tpu.dimension_semantics<arbitrary>], iteration_bounds = array<i64: 1, 1>, scalar_prefetch = 0 : i64, scratch_operands = 1 : i64, tpu.core_type = #tpu.core_type<tc>, window_params = [{pipeline_mode = #tpu.pipeline_mode<synchronous>, transform_indices = @transform_0, window_bounds = array<i64: 8, 1024>}, {transform_indices = @transform_1, window_bounds = array<i64: 1024, 384>}, {transform_indices = @transform_2, window_bounds = array<i64: 1, 384>}, {transform_indices = @transform_3, window_bounds = array<i64: 8, 384>}]} {
    %c0_i32 = arith.constant 0 : i32
    %0 = arith.cmpi eq, %arg1, %c0_i32 : i32
    %1 = arith.extui %0 : i1 to i32
    %c0_i32_0 = arith.constant 0 : i32
    %2 = arith.cmpi ne, %1, %c0_i32_0 : i32
    scf.if %2 {
      %cst_9 = arith.constant 0.000000e+00 : f32
      %15 = vector.broadcast %cst_9 : f32 to vector<8x384xf32>
      %c0_10 = arith.constant 0 : index
      %c0_11 = arith.constant 0 : index
      %16 = vector.load %arg6[%c0_10, %c0_11] : memref<8x384xf32, #tpu.memory_space<vmem>>, vector<8x384xf32>
      tpu.vector_store %arg6[%c0_10, %c0_11], %15 {strides = array<i32>} : memref<8x384xf32, #tpu.memory_space<vmem>>, vector<8x384xf32>,
    } else {
    }
    %c1024_i32 = arith.constant 1024 : i32
    %3 = arith.muli %arg1, %c1024_i32 : i32
    %4 = tpu.assume_multiple %3, 1024 : i32
    %c0 = arith.constant 0 : index
    %5 = arith.index_cast %4 : i32 to index
    %6 = vector.load %arg2[%c0, %5] : memref<8x1024xbf16, #tpu.memory_space<vmem>>, vector<8x1024xbf16>
    %c0_1 = arith.constant 0 : index
    %c0_2 = arith.constant 0 : index
    %7 = vector.load %arg6[%c0_1, %c0_2] : memref<8x384xf32, #tpu.memory_space<vmem>>, vector<8x384xf32>
    %c0_3 = arith.constant 0 : index
    %c0_4 = arith.constant 0 : index
    %8 = vector.load %arg3[%c0_3, %c0_4] : memref<1024x384xbf16, #tpu.memory_space<vmem>>, vector<1024x384xbf16>
    %cst = arith.constant dense<0.000000e+00> : vector<8x384xf32>
    %9 = tpu.matmul %6, %8, %cst {dimension_numbers = #tpu.dot_dimension_numbers<[1], [0], [0], [1], [0, 0, 1, 1], [], []>} : vector<8x1024xbf16>, vector<1024x384xbf16>, vector<8x384xf32> -> vector<8x384xf32>
    %10 = arith.addf %7, %9 : vector<8x384xf32>
    %c0_5 = arith.constant 0 : index
    %c0_6 = arith.constant 0 : index
    %11 = vector.load %arg6[%c0_5, %c0_6] : memref<8x384xf32, #tpu.memory_space<vmem>>, vector<8x384xf32>
    tpu.vector_store %arg6[%c0_5, %c0_6], %10 {strides = array<i32>} : memref<8x384xf32, #tpu.memory_space<vmem>>, vector<8x384xf32>,
    %c0_i32_7 = arith.constant 0 : i32
    %12 = arith.cmpi eq, %arg1, %c0_i32_7 : i32
    %13 = arith.extui %12 : i1 to i32
    %c0_i32_8 = arith.constant 0 : i32
    %14 = arith.cmpi ne, %13, %c0_i32_8 : i32
    scf.if %14 {
      %c0_9 = arith.constant 0 : index
      %c0_10 = arith.constant 0 : index
      %15 = vector.load %arg6[%c0_9, %c0_10] : memref<8x384xf32, #tpu.memory_space<vmem>>, vector<8x384xf32>
      %c0_11 = arith.constant 0 : index
      %c0_12 = arith.constant 0 : index
      %16 = vector.load %arg4[%c0_11, %c0_12] : memref<1x384xf32, #tpu.memory_space<vmem>>, vector<1x384xf32>
      %17 = vector.broadcast %16 : vector<1x384xf32> to vector<8x384xf32>
      %18 = arith.addf %15, %17 : vector<8x384xf32>
      %c0_13 = arith.constant 0 : index
      %c0_14 = arith.constant 0 : index
      %19 = vector.load %arg5[%c0_13, %c0_14] : memref<8x384xf32, #tpu.memory_space<vmem>>, vector<8x384xf32>
      tpu.vector_store %arg5[%c0_13, %c0_14], %18 {strides = array<i32>} : memref<8x384xf32, #tpu.memory_space<vmem>>, vector<8x384xf32>,
    } else {
    }
    return
  }
  func.func @transform_0(%arg0: i32, %arg1: i32) -> (i32, i32) {
    %c0_i32 = arith.constant 0 : i32
    %c0_i32_0 = arith.constant 0 : i32
    %c0_i32_1 = arith.constant 0 : i32
    return %c0_i32, %c0_i32_0 : i32, i32
  }
  func.func @transform_1(%arg0: i32, %arg1: i32) -> (i32, i32) {
    %c0_i32 = arith.constant 0 : i32
    return %arg1, %arg0 : i32, i32
  }
  func.func @transform_2(%arg0: i32, %arg1: i32) -> (i32, i32) {
    %c0_i32 = arith.constant 0 : i32
    %c0_i32_0 = arith.constant 0 : i32
    return %c0_i32, %arg0 : i32, i32
  }
  func.func @transform_3(%arg0: i32, %arg1: i32) -> (i32, i32) {
    %c0_i32 = arith.constant 0 : i32
    %c0_i32_0 = arith.constant 0 : i32
    return %c0_i32, %arg0 : i32, i32
  }
}

</mosaic_0001>

<llo_original>
// kernel: my_layers_pallas.1
$region0: #{my_layers_pallas.1}
  #allocation0 [shape = 'u32[]', space=smem, size = 0x4, offset = 0x4, fixed_abs, tag = 'smem constant byte address 0x4 - core index']
  #allocation1 [shape = 'u32[144,128]{1,0:T(1,128)}', space=vmem, size = 0x12000, scoped, tag = 'internal scratch']
  #allocation2 [shape = 'f32[8,384]{1,0:T(8,128)}', space=vmem, size = 0x3000, scoped, tag = 'scratch operand']
  %s0 = inlined_call_operand.vmem [shape: bf16[8,1024], index: 0, kind: input, shape index: {}]
  %s1 = inlined_call_operand.hbm [shape: bf16[1024,384], index: 1, kind: input, shape index: {}]
  %s2 = inlined_call_operand.vmem [shape: f32[1,384], index: 2, kind: input, shape index: {}]
  %s3 = inlined_call_operand.vmem [shape: f32[8,384], index: 3, kind: output, shape index: {}]
  %s4 = sld [smem:[#allocation0]]
  $region34: #{my_layers_pallas.1} parent=0
    _
  %s6 = ssub.s32 1, %s4
  %s7 = scalar_select 0, %s6, %s4
  $region1: #{my_layers_pallas.1} parent=0
    #allocation3 [shape = 'u8[786432]{0}', space=vmem, size = 0xc0000, scoped, tag = 'input window, operand 1, single buffered']
    #allocation4 [shape = 's32[1]{0}', space=sflag, size = 0x4, scoped, tag = 'scoped memory for my_layers_pallas.1']
    %8 = vsyncpa [#allocation4], 0
    // Predicated region
    $region2: #{my_layers_pallas.1} parent=1 // pred_check
      _
    $region3: #{my_layers_pallas.1} parent=1 // pred_check_branch
      %10 = sbr.rel (0) target = $region5
    $region4: #{my_layers_pallas.1} parent=1 // pred_region
      _
    $region5: #{my_layers_pallas.1} parent=1 // pred_fallthru
      _
    // Predicated region
    $region6: #{my_layers_pallas.1} parent=1 // pred_check
      _
    $region7: #{my_layers_pallas.1} parent=1 // pred_check_branch
      %12 = sbr.rel (0) target = $region9
    $region8: #{my_layers_pallas.1} parent=1 // pred_region
      %s14 = ssub.s32 24576, 24576
      %15 = vsyncadd [#allocation4], %s14
      %s16 = sshll.u32 [#allocation3], 4
      %s17 = int_to_ptr.vmem [resolvable:$true] %s16
      %22 = dma.hbm_to_vmem [thread:$0]  %s1, 24576, %s17, [#allocation4], 192, 192, 12
    $region9: #{my_layers_pallas.1} parent=1 // pred_fallthru
      _
    // Predicated region
    $region10: #{my_layers_pallas.1} parent=1 // pred_check
      _
    $region11: #{my_layers_pallas.1} parent=1 // pred_check_branch
      %24 = sbr.rel (0) target = $region13
    $region12: #{my_layers_pallas.1} parent=1 // pred_region
      _
    $region13: #{my_layers_pallas.1} parent=1 // pred_fallthru
      _
    // Predicated region
    $region14: #{my_layers_pallas.1} parent=1 // pred_check
      _
    $region15: #{my_layers_pallas.1} parent=1 // pred_check_branch
      %26 = sbr.rel (0) target = $region17
    $region16: #{my_layers_pallas.1} parent=1 // pred_region
      %27 = dma.done [#allocation4], 24576
    $region17: #{my_layers_pallas.1} parent=1 // pred_fallthru
      _
    %p29 = scmp.eq.s32.totalorder 0, 0
    // Predicated region
    $region18: #{my_layers_pallas.1} parent=1 // pred_check
      %p30 = pneg %p29
    $region19: #{my_layers_pallas.1} parent=1 // pred_check_branch
      %32 = sbr.rel (%p30) target = $region21
    $region20: #{my_layers_pallas.1} parent=1 // pred_region
      %33 = vst [vmem:[#allocation2] sm:$0xff] 0.0
      %34 = vst [vmem:[#allocation2 + $0x8] sm:$0xff] 0.0
      %35 = vst [vmem:[#allocation2 + $0x10] sm:$0xff] 0.0
    $region21: #{my_layers_pallas.1} parent=1 // pred_fallthru
      _
    %s36 = smul.u32 0, 1024
    %s37 = sshra.s32 %s36, 7
    %s38 = sand.u32 %s36, 127
    %s39 = smul.addr %s37, 4
    %s40 = scalar_lea.vmem %s0, %s39
    %v41 = vld [vmem:[%s40] sm:$0xff]
    %v42 = vld [vmem:[%s40 + $0x8] sm:$0xff]
    %v43 = vld [vmem:[%s40 + $0x10] sm:$0xff]
    %v44 = vld [vmem:[%s40 + $0x18] sm:$0xff]
    %v45 = vld [vmem:[#allocation2] sm:$0xff]
    %v46 = vld [vmem:[#allocation2 + $0x8] sm:$0xff]
    %v47 = vld [vmem:[#allocation2 + $0x10] sm:$0xff]
    %v48 = vld [vmem:[#allocation3] sm:$0xff]
    %v49 = vld [vmem:[#allocation3 + $0x8] sm:$0xf]
    %v50 = vld [vmem:[#allocation3 + $0xc] sm:$0xff]
    %v51 = vld [vmem:[#allocation3 + $0x14] sm:$0xf]
    %v52 = vld [vmem:[#allocation3 + $0x18] sm:$0xff]
    %v53 = vld [vmem:[#allocation3 + $0x20] sm:$0xf]
    %v54 = vld [vmem:[#allocation3 + $0x24] sm:$0xff]
    %v55 = vld [vmem:[#allocation3 + $0x2c] sm:$0xf]
    %v56 = vld [vmem:[#allocation3 + $0x30] sm:$0xff]
    %v57 = vld [vmem:[#allocation3 + $0x38] sm:$0xf]
    %v58 = vld [vmem:[#allocation3 + $0x3c] sm:$0xff]
    %v59 = vld [vmem:[#allocation3 + $0x44] sm:$0xf]
    %v60 = vld [vmem:[#allocation3 + $0x48] sm:$0xff]
    %v61 = vld [vmem:[#allocation3 + $0x50] sm:$0xf]
    %v62 = vld [vmem:[#allocation3 + $0x54] sm:$0xff]
    %v63 = vld [vmem:[#allocation3 + $0x5c] sm:$0xf]
    %v64 = vld [vmem:[#allocation3 + $0x60] sm:$0xff]
    %v65 = vld [vmem:[#allocation3 + $0x68] sm:$0xf]
    %v66 = vld [vmem:[#allocation3 + $0x6c] sm:$0xff]
    %v67 = vld [vmem:[#allocation3 + $0x74] sm:$0xf]
    %v68 = vld [vmem:[#allocation3 + $0x78] sm:$0xff]
    %v69 = vld [vmem:[#allocation3 + $0x80] sm:$0xf]
    %v70 = vld [vmem:[#allocation3 + $0x84] sm:$0xff]
    %v71 = vld [vmem:[#allocation3 + $0x8c] sm:$0xf]
    %v72 = vld [vmem:[#allocation3 + $0x90] sm:$0xff]
    %v73 = vld [vmem:[#allocation3 + $0x98] sm:$0xf]
    %v74 = vld [vmem:[#allocation3 + $0x9c] sm:$0xff]
    %v75 = vld [vmem:[#allocation3 + $0xa4] sm:$0xf]
    %v76 = vld [vmem:[#allocation3 + $0xa8] sm:$0xff]
    %v77 = vld [vmem:[#allocation3 + $0xb0] sm:$0xf]
    %v78 = vld [vmem:[#allocation3 + $0xb4] sm:$0xff]
    %v79 = vld [vmem:[#allocation3 + $0xbc] sm:$0xf]
    %v80 = vld [vmem:[#allocation3 + $0xc0] sm:$0xff]
    %v81 = vld [vmem:[#allocation3 + $0xc8] sm:$0xf]
    %v82 = vld [vmem:[#allocation3 + $0xcc] sm:$0xff]
    %v83 = vld [vmem:[#allocation3 + $0xd4] sm:$0xf]
    %v84 = vld [vmem:[#allocation3 + $0xd8] sm:$0xff]
    %v85 = vld [vmem:[#allocation3 + $0xe0] sm:$0xf]
    %v86 = vld [vmem:[#allocation3 + $0xe4] sm:$0xff]
    %v87 = vld [vmem:[#allocation3 + $0xec] sm:$0xf]
    %v88 = vld [vmem:[#allocation3 + $0xf0] sm:$0xff]
    %v89 = vld [vmem:[#allocation3 + $0xf8] sm:$0xf]
    %v90 = vld [vmem:[#allocation3 + $0xfc] sm:$0xff]
    %v91 = vld [vmem:[#allocation3 + $0x104] sm:$0xf]
    %v92 = vld [vmem:[#allocation3 + $0x108] sm:$0xff]
    %v93 = vld [vmem:[#allocation3 + $0x110] sm:$0xf]
    %v94 = vld [vmem:[#allocation3 + $0x114] sm:$0xff]
    %v95 = vld [vmem:[#allocation3 + $0x11c] sm:$0xf]
    %v96 = vld [vmem:[#allocation3 + $0x120] sm:$0xff]
    %v97 = vld [vmem:[#allocation3 + $0x128] sm:$0xf]
    %v98 = vld [vmem:[#allocation3 + $0x12c] sm:$0xff]
    %v99 = vld [vmem:[#allocation3 + $0x134] sm:$0xf]
    %v100 = vld [vmem:[#allocation3 + $0x138] sm:$0xff]
    %v101 = vld [vmem:[#allocation3 + $0x140] sm:$0xf]
    %v102 = vld [vmem:[#allocation3 + $0x144] sm:$0xff]
    %v103 = vld [vmem:[#allocation3 + $0x14c] sm:$0xf]
    %v104 = vld [vmem:[#allocation3 + $0x150] sm:$0xff]
    %v105 = vld [vmem:[#allocation3 + $0x158] sm:$0xf]
    %v106 = vld [vmem:[#allocation3 + $0x15c] sm:$0xff]
    %v107 = vld [vmem:[#allocation3 + $0x164] sm:$0xf]
    %v108 = vld [vmem:[#allocation3 + $0x168] sm:$0xff]
    %v109 = vld [vmem:[#allocation3 + $0x170] sm:$0xf]
    %v110 = vld [vmem:[#allocation3 + $0x174] sm:$0xff]
    %v111 = vld [vmem:[#allocation3 + $0x17c] sm:$0xf]
    %v112 = vld [vmem:[#allocation3 + $0x180] sm:$0xff]
    %v113 = vld [vmem:[#allocation3 + $0x188] sm:$0xf]
    %v114 = vld [vmem:[#allocation3 + $0x18c] sm:$0xff]
    %v115 = vld [vmem:[#allocation3 + $0x194] sm:$0xf]
    %v116 = vld [vmem:[#allocation3 + $0x198] sm:$0xff]
    %v117 = vld [vmem:[#allocation3 + $0x1a0] sm:$0xf]
    %v118 = vld [vmem:[#allocation3 + $0x1a4] sm:$0xff]
    %v119 = vld [vmem:[#allocation3 + $0x1ac] sm:$0xf]
    %v120 = vld [vmem:[#allocation3 + $0x1b0] sm:$0xff]
    %v121 = vld [vmem:[#allocation3 + $0x1b8] sm:$0xf]
    %v122 = vld [vmem:[#allocation3 + $0x1bc] sm:$0xff]
    %v123 = vld [vmem:[#allocation3 + $0x1c4] sm:$0xf]
    %v124 = vld [vmem:[#allocation3 + $0x1c8] sm:$0xff]
    %v125 = vld [vmem:[#allocation3 + $0x1d0] sm:$0xf]
    %v126 = vld [vmem:[#allocation3 + $0x1d4] sm:$0xff]
    %v127 = vld [vmem:[#allocation3 + $0x1dc] sm:$0xf]
    %v128 = vld [vmem:[#allocation3 + $0x1e0] sm:$0xff]
    %v129 = vld [vmem:[#allocation3 + $0x1e8] sm:$0xf]
    %v130 = vld [vmem:[#allocation3 + $0x1ec] sm:$0xff]
    %v131 = vld [vmem:[#allocation3 + $0x1f4] sm:$0xf]
    %v132 = vld [vmem:[#allocation3 + $0x1f8] sm:$0xff]
    %v133 = vld [vmem:[#allocation3 + $0x200] sm:$0xf]
    %v134 = vld [vmem:[#allocation3 + $0x204] sm:$0xff]
    %v135 = vld [vmem:[#allocation3 + $0x20c] sm:$0xf]
    %v136 = vld [vmem:[#allocation3 + $0x210] sm:$0xff]
    %v137 = vld [vmem:[#allocation3 + $0x218] sm:$0xf]
    %v138 = vld [vmem:[#allocation3 + $0x21c] sm:$0xff]
    %v139 = vld [vmem:[#allocation3 + $0x224] sm:$0xf]
    %v140 = vld [vmem:[#allocation3 + $0x228] sm:$0xff]
    %v141 = vld [vmem:[#allocation3 + $0x230] sm:$0xf]
    %v142 = vld [vmem:[#allocation3 + $0x234] sm:$0xff]
    %v143 = vld [vmem:[#allocation3 + $0x23c] sm:$0xf]
    %v144 = vld [vmem:[#allocation3 + $0x240] sm:$0xff]
    %v145 = vld [vmem:[#allocation3 + $0x248] sm:$0xf]
    %v146 = vld [vmem:[#allocation3 + $0x24c] sm:$0xff]
    %v147 = vld [vmem:[#allocation3 + $0x254] sm:$0xf]
    %v148 = vld [vmem:[#allocation3 + $0x258] sm:$0xff]
    %v149 = vld [vmem:[#allocation3 + $0x260] sm:$0xf]
    %v150 = vld [vmem:[#allocation3 + $0x264] sm:$0xff]
    %v151 = vld [vmem:[#allocation3 + $0x26c] sm:$0xf]
    %v152 = vld [vmem:[#allocation3 + $0x270] sm:$0xff]
    %v153 = vld [vmem:[#allocation3 + $0x278] sm:$0xf]
    %v154 = vld [vmem:[#allocation3 + $0x27c] sm:$0xff]
    %v155 = vld [vmem:[#allocation3 + $0x284] sm:$0xf]
    %v156 = vld [vmem:[#allocation3 + $0x288] sm:$0xff]
    %v157 = vld [vmem:[#allocation3 + $0x290] sm:$0xf]
    %v158 = vld [vmem:[#allocation3 + $0x294] sm:$0xff]
    %v159 = vld [vmem:[#allocation3 + $0x29c] sm:$0xf]
    %v160 = vld [vmem:[#allocation3 + $0x2a0] sm:$0xff]
    %v161 = vld [vmem:[#allocation3 + $0x2a8] sm:$0xf]
    %v162 = vld [vmem:[#allocation3 + $0x2ac] sm:$0xff]
    %v163 = vld [vmem:[#allocation3 + $0x2b4] sm:$0xf]
    %v164 = vld [vmem:[#allocation3 + $0x2b8] sm:$0xff]
    %v165 = vld [vmem:[#allocation3 + $0x2c0] sm:$0xf]
    %v166 = vld [vmem:[#allocation3 + $0x2c4] sm:$0xff]
    %v167 = vld [vmem:[#allocation3 + $0x2cc] sm:$0xf]
    %v168 = vld [vmem:[#allocation3 + $0x2d0] sm:$0xff]
    %v169 = vld [vmem:[#allocation3 + $0x2d8] sm:$0xf]
    %v170 = vld [vmem:[#allocation3 + $0x2dc] sm:$0xff]
    %v171 = vld [vmem:[#allocation3 + $0x2e4] sm:$0xf]
    %v172 = vld [vmem:[#allocation3 + $0x2e8] sm:$0xff]
    %v173 = vld [vmem:[#allocation3 + $0x2f0] sm:$0xf]
    %v174 = vld [vmem:[#allocation3 + $0x2f4] sm:$0xff]
    %v175 = vld [vmem:[#allocation3 + $0x2fc] sm:$0xf]
    %v176 = vld [vmem:[#allocation3 + $0x300] sm:$0xff]
    %v177 = vld [vmem:[#allocation3 + $0x308] sm:$0xf]
    %v178 = vld [vmem:[#allocation3 + $0x30c] sm:$0xff]
    %v179 = vld [vmem:[#allocation3 + $0x314] sm:$0xf]
    %v180 = vld [vmem:[#allocation3 + $0x318] sm:$0xff]
    %v181 = vld [vmem:[#allocation3 + $0x320] sm:$0xf]
    %v182 = vld [vmem:[#allocation3 + $0x324] sm:$0xff]
    %v183 = vld [vmem:[#allocation3 + $0x32c] sm:$0xf]
    %v184 = vld [vmem:[#allocation3 + $0x330] sm:$0xff]
    %v185 = vld [vmem:[#allocation3 + $0x338] sm:$0xf]
    %v186 = vld [vmem:[#allocation3 + $0x33c] sm:$0xff]
    %v187 = vld [vmem:[#allocation3 + $0x344] sm:$0xf]
    %v188 = vld [vmem:[#allocation3 + $0x348] sm:$0xff]
    %v189 = vld [vmem:[#allocation3 + $0x350] sm:$0xf]
    %v190 = vld [vmem:[#allocation3 + $0x354] sm:$0xff]
    %v191 = vld [vmem:[#allocation3 + $0x35c] sm:$0xf]
    %v192 = vld [vmem:[#allocation3 + $0x360] sm:$0xff]
    %v193 = vld [vmem:[#allocation3 + $0x368] sm:$0xf]
    %v194 = vld [vmem:[#allocation3 + $0x36c] sm:$0xff]
    %v195 = vld [vmem:[#allocation3 + $0x374] sm:$0xf]
    %v196 = vld [vmem:[#allocation3 + $0x378] sm:$0xff]
    %v197 = vld [vmem:[#allocation3 + $0x380] sm:$0xf]
    %v198 = vld [vmem:[#allocation3 + $0x384] sm:$0xff]
    %v199 = vld [vmem:[#allocation3 + $0x38c] sm:$0xf]
    %v200 = vld [vmem:[#allocation3 + $0x390] sm:$0xff]
    %v201 = vld [vmem:[#allocation3 + $0x398] sm:$0xf]
    %v202 = vld [vmem:[#allocation3 + $0x39c] sm:$0xff]
    %v203 = vld [vmem:[#allocation3 + $0x3a4] sm:$0xf]
    %v204 = vld [vmem:[#allocation3 + $0x3a8] sm:$0xff]
    %v205 = vld [vmem:[#allocation3 + $0x3b0] sm:$0xf]
    %v206 = vld [vmem:[#allocation3 + $0x3b4] sm:$0xff]
    %v207 = vld [vmem:[#allocation3 + $0x3bc] sm:$0xf]
    %v208 = vld [vmem:[#allocation3 + $0x3c0] sm:$0xff]
    %v209 = vld [vmem:[#allocation3 + $0x3c8] sm:$0xf]
    %v210 = vld [vmem:[#allocation3 + $0x3cc] sm:$0xff]
    %v211 = vld [vmem:[#allocation3 + $0x3d4] sm:$0xf]
    %v212 = vld [vmem:[#allocation3 + $0x3d8] sm:$0xff]
    %v213 = vld [vmem:[#allocation3 + $0x3e0] sm:$0xf]
    %v214 = vld [vmem:[#allocation3 + $0x3e4] sm:$0xff]
    %v215 = vld [vmem:[#allocation3 + $0x3ec] sm:$0xf]
    %v216 = vld [vmem:[#allocation3 + $0x3f0] sm:$0xff]
    %v217 = vld [vmem:[#allocation3 + $0x3f8] sm:$0xf]
    %v218 = vld [vmem:[#allocation3 + $0x3fc] sm:$0xff]
    %v219 = vld [vmem:[#allocation3 + $0x404] sm:$0xf]
    %v220 = vld [vmem:[#allocation3 + $0x408] sm:$0xff]
    %v221 = vld [vmem:[#allocation3 + $0x410] sm:$0xf]
    %v222 = vld [vmem:[#allocation3 + $0x414] sm:$0xff]
    %v223 = vld [vmem:[#allocation3 + $0x41c] sm:$0xf]
    %v224 = vld [vmem:[#allocation3 + $0x420] sm:$0xff]
    %v225 = vld [vmem:[#allocation3 + $0x428] sm:$0xf]
    %v226 = vld [vmem:[#allocation3 + $0x42c] sm:$0xff]
    %v227 = vld [vmem:[#allocation3 + $0x434] sm:$0xf]
    %v228 = vld [vmem:[#allocation3 + $0x438] sm:$0xff]
    %v229 = vld [vmem:[#allocation3 + $0x440] sm:$0xf]
    %v230 = vld [vmem:[#allocation3 + $0x444] sm:$0xff]
    %v231 = vld [vmem:[#allocation3 + $0x44c] sm:$0xf]
    %v232 = vld [vmem:[#allocation3 + $0x450] sm:$0xff]
    %v233 = vld [vmem:[#allocation3 + $0x458] sm:$0xf]
    %v234 = vld [vmem:[#allocation3 + $0x45c] sm:$0xff]
    %v235 = vld [vmem:[#allocation3 + $0x464] sm:$0xf]
    %v236 = vld [vmem:[#allocation3 + $0x468] sm:$0xff]
    %v237 = vld [vmem:[#allocation3 + $0x470] sm:$0xf]
    %v238 = vld [vmem:[#allocation3 + $0x474] sm:$0xff]
    %v239 = vld [vmem:[#allocation3 + $0x47c] sm:$0xf]
    %v240 = vld [vmem:[#allocation3 + $0x480] sm:$0xff]
    %v241 = vld [vmem:[#allocation3 + $0x488] sm:$0xf]
    %v242 = vld [vmem:[#allocation3 + $0x48c] sm:$0xff]
    %v243 = vld [vmem:[#allocation3 + $0x494] sm:$0xf]
    %v244 = vld [vmem:[#allocation3 + $0x498] sm:$0xff]
    %v245 = vld [vmem:[#allocation3 + $0x4a0] sm:$0xf]
    %v246 = vld [vmem:[#allocation3 + $0x4a4] sm:$0xff]
    %v247 = vld [vmem:[#allocation3 + $0x4ac] sm:$0xf]
    %v248 = vld [vmem:[#allocation3 + $0x4b0] sm:$0xff]
    %v249 = vld [vmem:[#allocation3 + $0x4b8] sm:$0xf]
    %v250 = vld [vmem:[#allocation3 + $0x4bc] sm:$0xff]
    %v251 = vld [vmem:[#allocation3 + $0x4c4] sm:$0xf]
    %v252 = vld [vmem:[#allocation3 + $0x4c8] sm:$0xff]
    %v253 = vld [vmem:[#allocation3 + $0x4d0] sm:$0xf]
    %v254 = vld [vmem:[#allocation3 + $0x4d4] sm:$0xff]
    %v255 = vld [vmem:[#allocation3 + $0x4dc] sm:$0xf]
    %v256 = vld [vmem:[#allocation3 + $0x4e0] sm:$0xff]
    %v257 = vld [vmem:[#allocation3 + $0x4e8] sm:$0xf]
    %v258 = vld [vmem:[#allocation3 + $0x4ec] sm:$0xff]
    %v259 = vld [vmem:[#allocation3 + $0x4f4] sm:$0xf]
    %v260 = vld [vmem:[#allocation3 + $0x4f8] sm:$0xff]
    %v261 = vld [vmem:[#allocation3 + $0x500] sm:$0xf]
    %v262 = vld [vmem:[#allocation3 + $0x504] sm:$0xff]
    %v263 = vld [vmem:[#allocation3 + $0x50c] sm:$0xf]
    %v264 = vld [vmem:[#allocation3 + $0x510] sm:$0xff]
    %v265 = vld [vmem:[#allocation3 + $0x518] sm:$0xf]
    %v266 = vld [vmem:[#allocation3 + $0x51c] sm:$0xff]
    %v267 = vld [vmem:[#allocation3 + $0x524] sm:$0xf]
    %v268 = vld [vmem:[#allocation3 + $0x528] sm:$0xff]
    %v269 = vld [vmem:[#allocation3 + $0x530] sm:$0xf]
    %v270 = vld [vmem:[#allocation3 + $0x534] sm:$0xff]
    %v271 = vld [vmem:[#allocation3 + $0x53c] sm:$0xf]
    %v272 = vld [vmem:[#allocation3 + $0x540] sm:$0xff]
    %v273 = vld [vmem:[#allocation3 + $0x548] sm:$0xf]
    %v274 = vld [vmem:[#allocation3 + $0x54c] sm:$0xff]
    %v275 = vld [vmem:[#allocation3 + $0x554] sm:$0xf]
    %v276 = vld [vmem:[#allocation3 + $0x558] sm:$0xff]
    %v277 = vld [vmem:[#allocation3 + $0x560] sm:$0xf]
    %v278 = vld [vmem:[#allocation3 + $0x564] sm:$0xff]
    %v279 = vld [vmem:[#allocation3 + $0x56c] sm:$0xf]
    %v280 = vld [vmem:[#allocation3 + $0x570] sm:$0xff]
    %v281 = vld [vmem:[#allocation3 + $0x578] sm:$0xf]
    %v282 = vld [vmem:[#allocation3 + $0x57c] sm:$0xff]
    %v283 = vld [vmem:[#allocation3 + $0x584] sm:$0xf]
    %v284 = vld [vmem:[#allocation3 + $0x588] sm:$0xff]
    %v285 = vld [vmem:[#allocation3 + $0x590] sm:$0xf]
    %v286 = vld [vmem:[#allocation3 + $0x594] sm:$0xff]
    %v287 = vld [vmem:[#allocation3 + $0x59c] sm:$0xf]
    %v288 = vld [vmem:[#allocation3 + $0x5a0] sm:$0xff]
    %v289 = vld [vmem:[#allocation3 + $0x5a8] sm:$0xf]
    %v290 = vld [vmem:[#allocation3 + $0x5ac] sm:$0xff]
    %v291 = vld [vmem:[#allocation3 + $0x5b4] sm:$0xf]
    %v292 = vld [vmem:[#allocation3 + $0x5b8] sm:$0xff]
    %v293 = vld [vmem:[#allocation3 + $0x5c0] sm:$0xf]
    %v294 = vld [vmem:[#allocation3 + $0x5c4] sm:$0xff]
    %v295 = vld [vmem:[#allocation3 + $0x5cc] sm:$0xf]
    %v296 = vld [vmem:[#allocation3 + $0x5d0] sm:$0xff]
    %v297 = vld [vmem:[#allocation3 + $0x5d8] sm:$0xf]
    %v298 = vld [vmem:[#allocation3 + $0x5dc] sm:$0xff]
    %v299 = vld [vmem:[#allocation3 + $0x5e4] sm:$0xf]
    %v300 = vld [vmem:[#allocation3 + $0x5e8] sm:$0xff]
    %v301 = vld [vmem:[#allocation3 + $0x5f0] sm:$0xf]
    %v302 = vld [vmem:[#allocation3 + $0x5f4] sm:$0xff]
    %v303 = vld [vmem:[#allocation3 + $0x5fc] sm:$0xf]
    %v308 = vunpack.c.l.b16 %v41
    %v309 = vunpack.c.h.b16 %v41
    %v310 = vunpack.c.l.b16 %v42
    %v311 = vunpack.c.h.b16 %v42
    %v312 = vunpack.c.l.b16 %v43
    %v313 = vunpack.c.h.b16 %v43
    %v314 = vunpack.c.l.b16 %v44
    %v315 = vunpack.c.h.b16 %v44
    %v316 = vpack.c.b16 %v308, %v308
    %v317 = vpack.c.b16 %v309, %v309
    %v318 = vpack.c.b16 %v310, %v310
    %v319 = vpack.c.b16 %v311, %v311
    %v320 = vpack.c.b16 %v312, %v312
    %v321 = vpack.c.b16 %v313, %v313
    %v322 = vpack.c.b16 %v314, %v314
    %v323 = vpack.c.b16 %v315, %v315
    %v588 = vunpack.c.l.b16 %v48
    %v589 = vunpack.c.h.b16 %v48
    %v590 = vunpack.c.l.b16 %v49
    %v591 = vunpack.c.l.b16 %v50
    %v592 = vunpack.c.h.b16 %v50
    %v593 = vunpack.c.l.b16 %v51
    %v594 = vunpack.c.l.b16 %v52
    %v595 = vunpack.c.h.b16 %v52
    %v596 = vunpack.c.l.b16 %v53
    %v597 = vunpack.c.l.b16 %v54
    %v598 = vunpack.c.h.b16 %v54
    %v599 = vunpack.c.l.b16 %v55
    %v600 = vunpack.c.l.b16 %v56
    %v601 = vunpack.c.h.b16 %v56
    %v602 = vunpack.c.l.b16 %v57
    %v603 = vunpack.c.l.b16 %v58
    %v604 = vunpack.c.h.b16 %v58
    %v605 = vunpack.c.l.b16 %v59
    %v606 = vunpack.c.l.b16 %v60
    %v607 = vunpack.c.h.b16 %v60
    %v608 = vunpack.c.l.b16 %v61
    %v609 = vunpack.c.l.b16 %v62
    %v610 = vunpack.c.h.b16 %v62
    %v611 = vunpack.c.l.b16 %v63
    %v612 = vunpack.c.l.b16 %v64
    %v613 = vunpack.c.h.b16 %v64
    %v614 = vunpack.c.l.b16 %v65
    %v615 = vunpack.c.l.b16 %v66
    %v616 = vunpack.c.h.b16 %v66
    %v617 = vunpack.c.l.b16 %v67
    %v618 = vunpack.c.l.b16 %v68
    %v619 = vunpack.c.h.b16 %v68
    %v620 = vunpack.c.l.b16 %v69
    %v621 = vunpack.c.l.b16 %v70
    %v622 = vunpack.c.h.b16 %v70
    %v623 = vunpack.c.l.b16 %v71
    %v624 = vunpack.c.l.b16 %v72
    %v625 = vunpack.c.h.b16 %v72
    %v626 = vunpack.c.l.b16 %v73
    %v627 = vunpack.c.l.b16 %v74
    %v628 = vunpack.c.h.b16 %v74
    %v629 = vunpack.c.l.b16 %v75
    %v630 = vunpack.c.l.b16 %v76
    %v631 = vunpack.c.h.b16 %v76
    %v632 = vunpack.c.l.b16 %v77
    %v633 = vunpack.c.l.b16 %v78
    %v634 = vunpack.c.h.b16 %v78
    %v635 = vunpack.c.l.b16 %v79
    %v636 = vunpack.c.l.b16 %v80
    %v637 = vunpack.c.h.b16 %v80
    %v638 = vunpack.c.l.b16 %v81
    %v639 = vunpack.c.l.b16 %v82
    %v640 = vunpack.c.h.b16 %v82
    %v641 = vunpack.c.l.b16 %v83
    %v642 = vunpack.c.l.b16 %v84
    %v643 = vunpack.c.h.b16 %v84
    %v644 = vunpack.c.l.b16 %v85
    %v645 = vunpack.c.l.b16 %v86
    %v646 = vunpack.c.h.b16 %v86
    %v647 = vunpack.c.l.b16 %v87
    %v648 = vunpack.c.l.b16 %v88
    %v649 = vunpack.c.h.b16 %v88
    %v650 = vunpack.c.l.b16 %v89
    %v651 = vunpack.c.l.b16 %v90
    %v652 = vunpack.c.h.b16 %v90
    %v653 = vunpack.c.l.b16 %v91
    %v654 = vunpack.c.l.b16 %v92
    %v655 = vunpack.c.h.b16 %v92
    %v656 = vunpack.c.l.b16 %v93
    %v657 = vunpack.c.l.b16 %v94
    %v658 = vunpack.c.h.b16 %v94
    %v659 = vunpack.c.l.b16 %v95
    %v660 = vunpack.c.l.b16 %v96
    %v661 = vunpack.c.h.b16 %v96
    %v662 = vunpack.c.l.b16 %v97
    %v663 = vunpack.c.l.b16 %v98
    %v664 = vunpack.c.h.b16 %v98
    %v665 = vunpack.c.l.b16 %v99
    %v666 = vunpack.c.l.b16 %v100
    %v667 = vunpack.c.h.b16 %v100
    %v668 = vunpack.c.l.b16 %v101
    %v669 = vunpack.c.l.b16 %v102
    %v670 = vunpack.c.h.b16 %v102
    %v671 = vunpack.c.l.b16 %v103
    %v672 = vunpack.c.l.b16 %v104
    %v673 = vunpack.c.h.b16 %v104
    %v674 = vunpack.c.l.b16 %v105
    %v675 = vunpack.c.l.b16 %v106
    %v676 = vunpack.c.h.b16 %v106
    %v677 = vunpack.c.l.b16 %v107
    %v678 = vunpack.c.l.b16 %v108
    %v679 = vunpack.c.h.b16 %v108
    %v680 = vunpack.c.l.b16 %v109
    %v681 = vunpack.c.l.b16 %v110
    %v682 = vunpack.c.h.b16 %v110
    %v683 = vunpack.c.l.b16 %v111
    %v684 = vunpack.c.l.b16 %v112
    %v685 = vunpack.c.h.b16 %v112
    %v686 = vunpack.c.l.b16 %v113
    %v687 = vunpack.c.l.b16 %v114
    %v688 = vunpack.c.h.b16 %v114
    %v689 = vunpack.c.l.b16 %v115
    %v690 = vunpack.c.l.b16 %v116
    %v691 = vunpack.c.h.b16 %v116
    %v692 = vunpack.c.l.b16 %v117
    %v693 = vunpack.c.l.b16 %v118
    %v694 = vunpack.c.h.b16 %v118
    %v695 = vunpack.c.l.b16 %v119
    %v696 = vunpack.c.l.b16 %v120
    %v697 = vunpack.c.h.b16 %v120
    %v698 = vunpack.c.l.b16 %v121
    %v699 = vunpack.c.l.b16 %v122
    %v700 = vunpack.c.h.b16 %v122
    %v701 = vunpack.c.l.b16 %v123
    %v702 = vunpack.c.l.b16 %v124
    %v703 = vunpack.c.h.b16 %v124
    %v704 = vunpack.c.l.b16 %v125
    %v705 = vunpack.c.l.b16 %v126
    %v706 = vunpack.c.h.b16 %v126
    %v707 = vunpack.c.l.b16 %v127
    %v708 = vunpack.c.l.b16 %v128
    %v709 = vunpack.c.h.b16 %v128
    %v710 = vunpack.c.l.b16 %v129
    %v711 = vunpack.c.l.b16 %v130
    %v712 = vunpack.c.h.b16 %v130
    %v713 = vunpack.c.l.b16 %v131
    %v714 = vunpack.c.l.b16 %v132
    %v715 = vunpack.c.h.b16 %v132
    %v716 = vunpack.c.l.b16 %v133
    %v717 = vunpack.c.l.b16 %v134
    %v718 = vunpack.c.h.b16 %v134
    %v719 = vunpack.c.l.b16 %v135
    %v720 = vunpack.c.l.b16 %v136
    %v721 = vunpack.c.h.b16 %v136
    %v722 = vunpack.c.l.b16 %v137
    %v723 = vunpack.c.l.b16 %v138
    %v724 = vunpack.c.h.b16 %v138
    %v725 = vunpack.c.l.b16 %v139
    %v726 = vunpack.c.l.b16 %v140
    %v727 = vunpack.c.h.b16 %v140
    %v728 = vunpack.c.l.b16 %v141
    %v729 = vunpack.c.l.b16 %v142
    %v730 = vunpack.c.h.b16 %v142
    %v731 = vunpack.c.l.b16 %v143
    %v732 = vunpack.c.l.b16 %v144
    %v733 = vunpack.c.h.b16 %v144
    %v734 = vunpack.c.l.b16 %v145
    %v735 = vunpack.c.l.b16 %v146
    %v736 = vunpack.c.h.b16 %v146
    %v737 = vunpack.c.l.b16 %v147
    %v738 = vunpack.c.l.b16 %v148
    %v739 = vunpack.c.h.b16 %v148
    %v740 = vunpack.c.l.b16 %v149
    %v741 = vunpack.c.l.b16 %v150
    %v742 = vunpack.c.h.b16 %v150
    %v743 = vunpack.c.l.b16 %v151
    %v744 = vunpack.c.l.b16 %v152
    %v745 = vunpack.c.h.b16 %v152
    %v746 = vunpack.c.l.b16 %v153
    %v747 = vunpack.c.l.b16 %v154
    %v748 = vunpack.c.h.b16 %v154
    %v749 = vunpack.c.l.b16 %v155
    %v750 = vunpack.c.l.b16 %v156
    %v751 = vunpack.c.h.b16 %v156
    %v752 = vunpack.c.l.b16 %v157
    %v753 = vunpack.c.l.b16 %v158
    %v754 = vunpack.c.h.b16 %v158
    %v755 = vunpack.c.l.b16 %v159
    %v756 = vunpack.c.l.b16 %v160
    %v757 = vunpack.c.h.b16 %v160
    %v758 = vunpack.c.l.b16 %v161
    %v759 = vunpack.c.l.b16 %v162
    %v760 = vunpack.c.h.b16 %v162
    %v761 = vunpack.c.l.b16 %v163
    %v762 = vunpack.c.l.b16 %v164
    %v763 = vunpack.c.h.b16 %v164
    %v764 = vunpack.c.l.b16 %v165
    %v765 = vunpack.c.l.b16 %v166
    %v766 = vunpack.c.h.b16 %v166
    %v767 = vunpack.c.l.b16 %v167
    %v768 = vunpack.c.l.b16 %v168
    %v769 = vunpack.c.h.b16 %v168
    %v770 = vunpack.c.l.b16 %v169
    %v771 = vunpack.c.l.b16 %v170
    %v772 = vunpack.c.h.b16 %v170
    %v773 = vunpack.c.l.b16 %v171
    %v774 = vunpack.c.l.b16 %v172
    %v775 = vunpack.c.h.b16 %v172
    %v776 = vunpack.c.l.b16 %v173
    %v777 = vunpack.c.l.b16 %v174
    %v778 = vunpack.c.h.b16 %v174
    %v779 = vunpack.c.l.b16 %v175
    %v780 = vunpack.c.l.b16 %v176
    %v781 = vunpack.c.h.b16 %v176
    %v782 = vunpack.c.l.b16 %v177
    %v783 = vunpack.c.l.b16 %v178
    %v784 = vunpack.c.h.b16 %v178
    %v785 = vunpack.c.l.b16 %v179
    %v786 = vunpack.c.l.b16 %v180
    %v787 = vunpack.c.h.b16 %v180
    %v788 = vunpack.c.l.b16 %v181
    %v789 = vunpack.c.l.b16 %v182
    %v790 = vunpack.c.h.b16 %v182
    %v791 = vunpack.c.l.b16 %v183
    %v792 = vunpack.c.l.b16 %v184
    %v793 = vunpack.c.h.b16 %v184
    %v794 = vunpack.c.l.b16 %v185
    %v795 = vunpack.c.l.b16 %v186
    %v796 = vunpack.c.h.b16 %v186
    %v797 = vunpack.c.l.b16 %v187
    %v798 = vunpack.c.l.b16 %v188
    %v799 = vunpack.c.h.b16 %v188
    %v800 = vunpack.c.l.b16 %v189
    %v801 = vunpack.c.l.b16 %v190
    %v802 = vunpack.c.h.b16 %v190
    %v803 = vunpack.c.l.b16 %v191
    %v804 = vunpack.c.l.b16 %v192
    %v805 = vunpack.c.h.b16 %v192
    %v806 = vunpack.c.l.b16 %v193
    %v807 = vunpack.c.l.b16 %v194
    %v808 = vunpack.c.h.b16 %v194
    %v809 = vunpack.c.l.b16 %v195
    %v810 = vunpack.c.l.b16 %v196
    %v811 = vunpack.c.h.b16 %v196
    %v812 = vunpack.c.l.b16 %v197
    %v813 = vunpack.c.l.b16 %v198
    %v814 = vunpack.c.h.b16 %v198
    %v815 = vunpack.c.l.b16 %v199
    %v816 = vunpack.c.l.b16 %v200
    %v817 = vunpack.c.h.b16 %v200
    %v818 = vunpack.c.l.b16 %v201
    %v819 = vunpack.c.l.b16 %v202
    %v820 = vunpack.c.h.b16 %v202
    %v821 = vunpack.c.l.b16 %v203
    %v822 = vunpack.c.l.b16 %v204
    %v823 = vunpack.c.h.b16 %v204
    %v824 = vunpack.c.l.b16 %v205
    %v825 = vunpack.c.l.b16 %v206
    %v826 = vunpack.c.h.b16 %v206
    %v827 = vunpack.c.l.b16 %v207
    %v828 = vunpack.c.l.b16 %v208
    %v829 = vunpack.c.h.b16 %v208
    %v830 = vunpack.c.l.b16 %v209
    %v831 = vunpack.c.l.b16 %v210
    %v832 = vunpack.c.h.b16 %v210
    %v833 = vunpack.c.l.b16 %v211
    %v834 = vunpack.c.l.b16 %v212
    %v835 = vunpack.c.h.b16 %v212
    %v836 = vunpack.c.l.b16 %v213
    %v837 = vunpack.c.l.b16 %v214
    %v838 = vunpack.c.h.b16 %v214
    %v839 = vunpack.c.l.b16 %v215
    %v840 = vunpack.c.l.b16 %v216
    %v841 = vunpack.c.h.b16 %v216
    %v842 = vunpack.c.l.b16 %v217
    %v843 = vunpack.c.l.b16 %v218
    %v844 = vunpack.c.h.b16 %v218
    %v845 = vunpack.c.l.b16 %v219
    %v846 = vunpack.c.l.b16 %v220
    %v847 = vunpack.c.h.b16 %v220
    %v848 = vunpack.c.l.b16 %v221
    %v849 = vunpack.c.l.b16 %v222
    %v850 = vunpack.c.h.b16 %v222
    %v851 = vunpack.c.l.b16 %v223
    %v852 = vunpack.c.l.b16 %v224
    %v853 = vunpack.c.h.b16 %v224
    %v854 = vunpack.c.l.b16 %v225
    %v855 = vunpack.c.l.b16 %v226
    %v856 = vunpack.c.h.b16 %v226
    %v857 = vunpack.c.l.b16 %v227
    %v858 = vunpack.c.l.b16 %v228
    %v859 = vunpack.c.h.b16 %v228
    %v860 = vunpack.c.l.b16 %v229
    %v861 = vunpack.c.l.b16 %v230
    %v862 = vunpack.c.h.b16 %v230
    %v863 = vunpack.c.l.b16 %v231
    %v864 = vunpack.c.l.b16 %v232
    %v865 = vunpack.c.h.b16 %v232
    %v866 = vunpack.c.l.b16 %v233
    %v867 = vunpack.c.l.b16 %v234
    %v868 = vunpack.c.h.b16 %v234
    %v869 = vunpack.c.l.b16 %v235
    %v870 = vunpack.c.l.b16 %v236
    %v871 = vunpack.c.h.b16 %v236
    %v872 = vunpack.c.l.b16 %v237
    %v873 = vunpack.c.l.b16 %v238
    %v874 = vunpack.c.h.b16 %v238
    %v875 = vunpack.c.l.b16 %v239
    %v876 = vunpack.c.l.b16 %v240
    %v877 = vunpack.c.h.b16 %v240
    %v878 = vunpack.c.l.b16 %v241
    %v879 = vunpack.c.l.b16 %v242
    %v880 = vunpack.c.h.b16 %v242
    %v881 = vunpack.c.l.b16 %v243
    %v882 = vunpack.c.l.b16 %v244
    %v883 = vunpack.c.h.b16 %v244
    %v884 = vunpack.c.l.b16 %v245
    %v885 = vunpack.c.l.b16 %v246
    %v886 = vunpack.c.h.b16 %v246
    %v887 = vunpack.c.l.b16 %v247
    %v888 = vunpack.c.l.b16 %v248
    %v889 = vunpack.c.h.b16 %v248
    %v890 = vunpack.c.l.b16 %v249
    %v891 = vunpack.c.l.b16 %v250
    %v892 = vunpack.c.h.b16 %v250
    %v893 = vunpack.c.l.b16 %v251
    %v894 = vunpack.c.l.b16 %v252
    %v895 = vunpack.c.h.b16 %v252
    %v896 = vunpack.c.l.b16 %v253
    %v897 = vunpack.c.l.b16 %v254
    %v898 = vunpack.c.h.b16 %v254
    %v899 = vunpack.c.l.b16 %v255
    %v900 = vunpack.c.l.b16 %v256
    %v901 = vunpack.c.h.b16 %v256
    %v902 = vunpack.c.l.b16 %v257
    %v903 = vunpack.c.l.b16 %v258
    %v904 = vunpack.c.h.b16 %v258
    %v905 = vunpack.c.l.b16 %v259
    %v906 = vunpack.c.l.b16 %v260
    %v907 = vunpack.c.h.b16 %v260
    %v908 = vunpack.c.l.b16 %v261
    %v909 = vunpack.c.l.b16 %v262
    %v910 = vunpack.c.h.b16 %v262
    %v911 = vunpack.c.l.b16 %v263
    %v912 = vunpack.c.l.b16 %v264
    %v913 = vunpack.c.h.b16 %v264
    %v914 = vunpack.c.l.b16 %v265
    %v915 = vunpack.c.l.b16 %v266
    %v916 = vunpack.c.h.b16 %v266
    %v917 = vunpack.c.l.b16 %v267
    %v918 = vunpack.c.l.b16 %v268
    %v919 = vunpack.c.h.b16 %v268
    %v920 = vunpack.c.l.b16 %v269
    %v921 = vunpack.c.l.b16 %v270
    %v922 = vunpack.c.h.b16 %v270
    %v923 = vunpack.c.l.b16 %v271
    %v924 = vunpack.c.l.b16 %v272
    %v925 = vunpack.c.h.b16 %v272
    %v926 = vunpack.c.l.b16 %v273
    %v927 = vunpack.c.l.b16 %v274
    %v928 = vunpack.c.h.b16 %v274
    %v929 = vunpack.c.l.b16 %v275
    %v930 = vunpack.c.l.b16 %v276
    %v931 = vunpack.c.h.b16 %v276
    %v932 = vunpack.c.l.b16 %v277
    %v933 = vunpack.c.l.b16 %v278
    %v934 = vunpack.c.h.b16 %v278
    %v935 = vunpack.c.l.b16 %v279
    %v936 = vunpack.c.l.b16 %v280
    %v937 = vunpack.c.h.b16 %v280
    %v938 = vunpack.c.l.b16 %v281
    %v939 = vunpack.c.l.b16 %v282
    %v940 = vunpack.c.h.b16 %v282
    %v941 = vunpack.c.l.b16 %v283
    %v942 = vunpack.c.l.b16 %v284
    %v943 = vunpack.c.h.b16 %v284
    %v944 = vunpack.c.l.b16 %v285
    %v945 = vunpack.c.l.b16 %v286
    %v946 = vunpack.c.h.b16 %v286
    %v947 = vunpack.c.l.b16 %v287
    %v948 = vunpack.c.l.b16 %v288
    %v949 = vunpack.c.h.b16 %v288
    %v950 = vunpack.c.l.b16 %v289
    %v951 = vunpack.c.l.b16 %v290
    %v952 = vunpack.c.h.b16 %v290
    %v953 = vunpack.c.l.b16 %v291
    %v954 = vunpack.c.l.b16 %v292
    %v955 = vunpack.c.h.b16 %v292
    %v956 = vunpack.c.l.b16 %v293
    %v957 = vunpack.c.l.b16 %v294
    %v958 = vunpack.c.h.b16 %v294
    %v959 = vunpack.c.l.b16 %v295
    %v960 = vunpack.c.l.b16 %v296
    %v961 = vunpack.c.h.b16 %v296
    %v962 = vunpack.c.l.b16 %v297
    %v963 = vunpack.c.l.b16 %v298
    %v964 = vunpack.c.h.b16 %v298
    %v965 = vunpack.c.l.b16 %v299
    %v966 = vunpack.c.l.b16 %v300
    %v967 = vunpack.c.h.b16 %v300
    %v968 = vunpack.c.l.b16 %v301
    %v969 = vunpack.c.l.b16 %v302
    %v970 = vunpack.c.h.b16 %v302
    %v971 = vunpack.c.l.b16 %v303
    %v972 = vpack.c.b16 %v591, %v588
    %v973 = vpack.c.b16 %v592, %v589
    %v974 = vpack.c.b16 %v593, %v590
    %v975 = vpack.c.b16 %v597, %v594
    %v976 = vpack.c.b16 %v598, %v595
    %v977 = vpack.c.b16 %v599, %v596
    %v978 = vpack.c.b16 %v603, %v600
    %v979 = vpack.c.b16 %v604, %v601
    %v980 = vpack.c.b16 %v605, %v602
    %v981 = vpack.c.b16 %v609, %v606
    %v982 = vpack.c.b16 %v610, %v607
    %v983 = vpack.c.b16 %v611, %v608
    %v984 = vpack.c.b16 %v615, %v612
    %v985 = vpack.c.b16 %v616, %v613
    %v986 = vpack.c.b16 %v617, %v614
    %v987 = vpack.c.b16 %v621, %v618
    %v988 = vpack.c.b16 %v622, %v619
    %v989 = vpack.c.b16 %v623, %v620
    %v990 = vpack.c.b16 %v627, %v624
    %v991 = vpack.c.b16 %v628, %v625
    %v992 = vpack.c.b16 %v629, %v626
    %v993 = vpack.c.b16 %v633, %v630
    %v994 = vpack.c.b16 %v634, %v631
    %v995 = vpack.c.b16 %v635, %v632
    %v996 = vpack.c.b16 %v639, %v636
    %v997 = vpack.c.b16 %v640, %v637
    %v998 = vpack.c.b16 %v641, %v638
    %v999 = vpack.c.b16 %v645, %v642
    %v1000 = vpack.c.b16 %v646, %v643
    %v1001 = vpack.c.b16 %v647, %v644
    %v1002 = vpack.c.b16 %v651, %v648
    %v1003 = vpack.c.b16 %v652, %v649
    %v1004 = vpack.c.b16 %v653, %v650
    %v1005 = vpack.c.b16 %v657, %v654
    %v1006 = vpack.c.b16 %v658, %v655
    %v1007 = vpack.c.b16 %v659, %v656
    %v1008 = vpack.c.b16 %v663, %v660
    %v1009 = vpack.c.b16 %v664, %v661
    %v1010 = vpack.c.b16 %v665, %v662
    %v1011 = vpack.c.b16 %v669, %v666
    %v1012 = vpack.c.b16 %v670, %v667
    %v1013 = vpack.c.b16 %v671, %v668
    %v1014 = vpack.c.b16 %v675, %v672
    %v1015 = vpack.c.b16 %v676, %v673
    %v1016 = vpack.c.b16 %v677, %v674
    %v1017 = vpack.c.b16 %v681, %v678
    %v1018 = vpack.c.b16 %v682, %v679
    %v1019 = vpack.c.b16 %v683, %v680
    %v1020 = vpack.c.b16 %v687, %v684
    %v1021 = vpack.c.b16 %v688, %v685
    %v1022 = vpack.c.b16 %v689, %v686
    %v1023 = vpack.c.b16 %v693, %v690
    %v1024 = vpack.c.b16 %v694, %v691
    %v1025 = vpack.c.b16 %v695, %v692
    %v1026 = vpack.c.b16 %v699, %v696
    %v1027 = vpack.c.b16 %v700, %v697
    %v1028 = vpack.c.b16 %v701, %v698
    %v1029 = vpack.c.b16 %v705, %v702
    %v1030 = vpack.c.b16 %v706, %v703
    %v1031 = vpack.c.b16 %v707, %v704
    %v1032 = vpack.c.b16 %v711, %v708
    %v1033 = vpack.c.b16 %v712, %v709
    %v1034 = vpack.c.b16 %v713, %v710
    %v1035 = vpack.c.b16 %v717, %v714
    %v1036 = vpack.c.b16 %v718, %v715
    %v1037 = vpack.c.b16 %v719, %v716
    %v1038 = vpack.c.b16 %v723, %v720
    %v1039 = vpack.c.b16 %v724, %v721
    %v1040 = vpack.c.b16 %v725, %v722
    %v1041 = vpack.c.b16 %v729, %v726
    %v1042 = vpack.c.b16 %v730, %v727
    %v1043 = vpack.c.b16 %v731, %v728
    %v1044 = vpack.c.b16 %v735, %v732
    %v1045 = vpack.c.b16 %v736, %v733
    %v1046 = vpack.c.b16 %v737, %v734
    %v1047 = vpack.c.b16 %v741, %v738
    %v1048 = vpack.c.b16 %v742, %v739
    %v1049 = vpack.c.b16 %v743, %v740
    %v1050 = vpack.c.b16 %v747, %v744
    %v1051 = vpack.c.b16 %v748, %v745
    %v1052 = vpack.c.b16 %v749, %v746
    %v1053 = vpack.c.b16 %v753, %v750
    %v1054 = vpack.c.b16 %v754, %v751
    %v1055 = vpack.c.b16 %v755, %v752
    %v1056 = vpack.c.b16 %v759, %v756
    %v1057 = vpack.c.b16 %v760, %v757
    %v1058 = vpack.c.b16 %v761, %v758
    %v1059 = vpack.c.b16 %v765, %v762
    %v1060 = vpack.c.b16 %v766, %v763
    %v1061 = vpack.c.b16 %v767, %v764
    %v1062 = vpack.c.b16 %v771, %v768
    %v1063 = vpack.c.b16 %v772, %v769
    %v1064 = vpack.c.b16 %v773, %v770
    %v1065 = vpack.c.b16 %v777, %v774
    %v1066 = vpack.c.b16 %v778, %v775
    %v1067 = vpack.c.b16 %v779, %v776
    %v1068 = vpack.c.b16 %v783, %v780
    %v1069 = vpack.c.b16 %v784, %v781
    %v1070 = vpack.c.b16 %v785, %v782
    %v1071 = vpack.c.b16 %v789, %v786
    %v1072 = vpack.c.b16 %v790, %v787
    %v1073 = vpack.c.b16 %v791, %v788
    %v1074 = vpack.c.b16 %v795, %v792
    %v1075 = vpack.c.b16 %v796, %v793
    %v1076 = vpack.c.b16 %v797, %v794
    %v1077 = vpack.c.b16 %v801, %v798
    %v1078 = vpack.c.b16 %v802, %v799
    %v1079 = vpack.c.b16 %v803, %v800
    %v1080 = vpack.c.b16 %v807, %v804
    %v1081 = vpack.c.b16 %v808, %v805
    %v1082 = vpack.c.b16 %v809, %v806
    %v1083 = vpack.c.b16 %v813, %v810
    %v1084 = vpack.c.b16 %v814, %v811
    %v1085 = vpack.c.b16 %v815, %v812
    %v1086 = vpack.c.b16 %v819, %v816
    %v1087 = vpack.c.b16 %v820, %v817
    %v1088 = vpack.c.b16 %v821, %v818
    %v1089 = vpack.c.b16 %v825, %v822
    %v1090 = vpack.c.b16 %v826, %v823
    %v1091 = vpack.c.b16 %v827, %v824
    %v1092 = vpack.c.b16 %v831, %v828
    %v1093 = vpack.c.b16 %v832, %v829
    %v1094 = vpack.c.b16 %v833, %v830
    %v1095 = vpack.c.b16 %v837, %v834
    %v1096 = vpack.c.b16 %v838, %v835
    %v1097 = vpack.c.b16 %v839, %v836
    %v1098 = vpack.c.b16 %v843, %v840
    %v1099 = vpack.c.b16 %v844, %v841
    %v1100 = vpack.c.b16 %v845, %v842
    %v1101 = vpack.c.b16 %v849, %v846
    %v1102 = vpack.c.b16 %v850, %v847
    %v1103 = vpack.c.b16 %v851, %v848
    %v1104 = vpack.c.b16 %v855, %v852
    %v1105 = vpack.c.b16 %v856, %v853
    %v1106 = vpack.c.b16 %v857, %v854
    %v1107 = vpack.c.b16 %v861, %v858
    %v1108 = vpack.c.b16 %v862, %v859
    %v1109 = vpack.c.b16 %v863, %v860
    %v1110 = vpack.c.b16 %v867, %v864
    %v1111 = vpack.c.b16 %v868, %v865
    %v1112 = vpack.c.b16 %v869, %v866
    %v1113 = vpack.c.b16 %v873, %v870
    %v1114 = vpack.c.b16 %v874, %v871
    %v1115 = vpack.c.b16 %v875, %v872
    %v1116 = vpack.c.b16 %v879, %v876
    %v1117 = vpack.c.b16 %v880, %v877
    %v1118 = vpack.c.b16 %v881, %v878
    %v1119 = vpack.c.b16 %v885, %v882
    %v1120 = vpack.c.b16 %v886, %v883
    %v1121 = vpack.c.b16 %v887, %v884
    %v1122 = vpack.c.b16 %v891, %v888
    %v1123 = vpack.c.b16 %v892, %v889
    %v1124 = vpack.c.b16 %v893, %v890
    %v1125 = vpack.c.b16 %v897, %v894
    %v1126 = vpack.c.b16 %v898, %v895
    %v1127 = vpack.c.b16 %v899, %v896
    %v1128 = vpack.c.b16 %v903, %v900
    %v1129 = vpack.c.b16 %v904, %v901
    %v1130 = vpack.c.b16 %v905, %v902
    %v1131 = vpack.c.b16 %v909, %v906
    %v1132 = vpack.c.b16 %v910, %v907
    %v1133 = vpack.c.b16 %v911, %v908
    %v1134 = vpack.c.b16 %v915, %v912
    %v1135 = vpack.c.b16 %v916, %v913
    %v1136 = vpack.c.b16 %v917, %v914
    %v1137 = vpack.c.b16 %v921, %v918
    %v1138 = vpack.c.b16 %v922, %v919
    %v1139 = vpack.c.b16 %v923, %v920
    %v1140 = vpack.c.b16 %v927, %v924
    %v1141 = vpack.c.b16 %v928, %v925
    %v1142 = vpack.c.b16 %v929, %v926
    %v1143 = vpack.c.b16 %v933, %v930
    %v1144 = vpack.c.b16 %v934, %v931
    %v1145 = vpack.c.b16 %v935, %v932
    %v1146 = vpack.c.b16 %v939, %v936
    %v1147 = vpack.c.b16 %v940, %v937
    %v1148 = vpack.c.b16 %v941, %v938
    %v1149 = vpack.c.b16 %v945, %v942
    %v1150 = vpack.c.b16 %v946, %v943
    %v1151 = vpack.c.b16 %v947, %v944
    %v1152 = vpack.c.b16 %v951, %v948
    %v1153 = vpack.c.b16 %v952, %v949
    %v1154 = vpack.c.b16 %v953, %v950
    %v1155 = vpack.c.b16 %v957, %v954
    %v1156 = vpack.c.b16 %v958, %v955
    %v1157 = vpack.c.b16 %v959, %v956
    %v1158 = vpack.c.b16 %v963, %v960
    %v1159 = vpack.c.b16 %v964, %v961
    %v1160 = vpack.c.b16 %v965, %v962
    %v1161 = vpack.c.b16 %v969, %v966
    %v1162 = vpack.c.b16 %v970, %v967
    %v1163 = vpack.c.b16 %v971, %v968
    %1356 = vmatprep.subr.bf16.mxu0 %v973
    %1357 = vmatpush1.bf16.msra.mxu0 %v972
    %1358 = vmatprep.subr.bf16.mxu0 %v976
    %1359 = vmatpush1.bf16.msra.mxu0 %v975
    %1360 = vmatprep.subr.bf16.mxu0 %v979
    %1361 = vmatpush1.bf16.msra.mxu0 %v978
    %1362 = vmatprep.subr.bf16.mxu0 %v982
    %1363 = vmatpush1.bf16.msra.mxu0 %v981
    %1364 = vmatprep.subr.bf16.mxu0 %v985
    %1365 = vmatpush1.bf16.msra.mxu0 %v984
    %1366 = vmatprep.subr.bf16.mxu0 %v988
    %1367 = vmatpush1.bf16.msra.mxu0 %v987
    %1368 = vmatprep.subr.bf16.mxu0 %v991
    %1369 = vmatpush1.bf16.msra.mxu0 %v990
    %1370 = vmatprep.subr.bf16.mxu0 %v994
    %1371 = vmatpush1.bf16.msra.mxu0 %v993
    %1372 = vmatprep.subr.bf16.mxu0 %v997
    %1373 = vmatpush1.bf16.msra.mxu0 %v996
    %1374 = vmatprep.subr.bf16.mxu0 %v1000
    %1375 = vmatpush1.bf16.msra.mxu0 %v999
    %1376 = vmatprep.subr.bf16.mxu0 %v1003
    %1377 = vmatpush1.bf16.msra.mxu0 %v1002
    %1378 = vmatprep.subr.bf16.mxu0 %v1006
    %1379 = vmatpush1.bf16.msra.mxu0 %v1005
    %1380 = vmatprep.subr.bf16.mxu0 %v1009
    %1381 = vmatpush1.bf16.msra.mxu0 %v1008
    %1382 = vmatprep.subr.bf16.mxu0 %v1012
    %1383 = vmatpush1.bf16.msra.mxu0 %v1011
    %1384 = vmatprep.subr.bf16.mxu0 %v1015
    %1385 = vmatpush1.bf16.msra.mxu0 %v1014
    %1386 = vmatprep.subr.bf16.mxu0 %v1018
    %1387 = vmatpush1.bf16.msra.mxu0 %v1017
    %1388 = vmatprep.mubr.bf16.mxu0 %v317
    %1389 = vmatmul.mubr.bf16.gmra.mrb[0].mxu0 %v316
    %v1390 = vpop.f32.mrb[0].mxu0
    %v1391 = vadd.f32 0.0, %v1390
    %v1392 = vpop.f32.mrb[0].mxu0
    %v1393 = vadd.f32 0.0, %v1392
    %v1394 = vpop.f32.mrb[0].mxu0
    %v1395 = vpop.f32.mrb[0].mxu0
    %1396 = vdwg.mxu0
    %1397 = vmatprep.subr.bf16.mxu0 %v1021
    %1398 = vmatpush1.bf16.msra.mxu0 %v1020
    %1399 = vmatprep.subr.bf16.mxu0 %v1024
    %1400 = vmatpush1.bf16.msra.mxu0 %v1023
    %1401 = vmatprep.subr.bf16.mxu0 %v1027
    %1402 = vmatpush1.bf16.msra.mxu0 %v1026
    %1403 = vmatprep.subr.bf16.mxu0 %v1030
    %1404 = vmatpush1.bf16.msra.mxu0 %v1029
    %1405 = vmatprep.subr.bf16.mxu0 %v1033
    %1406 = vmatpush1.bf16.msra.mxu0 %v1032
    %1407 = vmatprep.subr.bf16.mxu0 %v1036
    %1408 = vmatpush1.bf16.msra.mxu0 %v1035
    %1409 = vmatprep.subr.bf16.mxu0 %v1039
    %1410 = vmatpush1.bf16.msra.mxu0 %v1038
    %1411 = vmatprep.subr.bf16.mxu0 %v1042
    %1412 = vmatpush1.bf16.msra.mxu0 %v1041
    %1413 = vmatprep.subr.bf16.mxu0 %v1045
    %1414 = vmatpush1.bf16.msra.mxu0 %v1044
    %1415 = vmatprep.subr.bf16.mxu0 %v1048
    %1416 = vmatpush1.bf16.msra.mxu0 %v1047
    %1417 = vmatprep.subr.bf16.mxu0 %v1051
    %1418 = vmatpush1.bf16.msra.mxu0 %v1050
    %1419 = vmatprep.subr.bf16.mxu0 %v1054
    %1420 = vmatpush1.bf16.msra.mxu0 %v1053
    %1421 = vmatprep.subr.bf16.mxu0 %v1057
    %1422 = vmatpush1.bf16.msra.mxu0 %v1056
    %1423 = vmatprep.subr.bf16.mxu0 %v1060
    %1424 = vmatpush1.bf16.msra.mxu0 %v1059
    %1425 = vmatprep.subr.bf16.mxu0 %v1063
    %1426 = vmatpush1.bf16.msra.mxu0 %v1062
    %1427 = vmatprep.subr.bf16.mxu0 %v1066
    %1428 = vmatpush1.bf16.msra.mxu0 %v1065
    %1429 = vmatprep.mubr.bf16.mxu0 %v319
    %1430 = vmatmul.mubr.bf16.gmra.mrb[0].mxu0 %v318
    %v1431 = vpop.f32.mrb[0].mxu0
    %v1432 = vadd.f32 %v1391, %v1431
    %v1433 = vpop.f32.mrb[0].mxu0
    %v1434 = vadd.f32 %v1393, %v1433
    %v1435 = vpop.f32.mrb[0].mxu0
    %v1436 = vpop.f32.mrb[0].mxu0
    %1437 = vdwg.mxu0
    %1438 = vmatprep.subr.bf16.mxu0 %v1069
    %1439 = vmatpush1.bf16.msra.mxu0 %v1068
    %1440 = vmatprep.subr.bf16.mxu0 %v1072
    %1441 = vmatpush1.bf16.msra.mxu0 %v1071
    %1442 = vmatprep.subr.bf16.mxu0 %v1075
    %1443 = vmatpush1.bf16.msra.mxu0 %v1074
    %1444 = vmatprep.subr.bf16.mxu0 %v1078
    %1445 = vmatpush1.bf16.msra.mxu0 %v1077
    %1446 = vmatprep.subr.bf16.mxu0 %v1081
    %1447 = vmatpush1.bf16.msra.mxu0 %v1080
    %1448 = vmatprep.subr.bf16.mxu0 %v1084
    %1449 = vmatpush1.bf16.msra.mxu0 %v1083
    %1450 = vmatprep.subr.bf16.mxu0 %v1087
    %1451 = vmatpush1.bf16.msra.mxu0 %v1086
    %1452 = vmatprep.subr.bf16.mxu0 %v1090
    %1453 = vmatpush1.bf16.msra.mxu0 %v1089
    %1454 = vmatprep.subr.bf16.mxu0 %v1093
    %1455 = vmatpush1.bf16.msra.mxu0 %v1092
    %1456 = vmatprep.subr.bf16.mxu0 %v1096
    %1457 = vmatpush1.bf16.msra.mxu0 %v1095
    %1458 = vmatprep.subr.bf16.mxu0 %v1099
    %1459 = vmatpush1.bf16.msra.mxu0 %v1098
    %1460 = vmatprep.subr.bf16.mxu0 %v1102
    %1461 = vmatpush1.bf16.msra.mxu0 %v1101
    %1462 = vmatprep.subr.bf16.mxu0 %v1105
    %1463 = vmatpush1.bf16.msra.mxu0 %v1104
    %1464 = vmatprep.subr.bf16.mxu0 %v1108
    %1465 = vmatpush1.bf16.msra.mxu0 %v1107
    %1466 = vmatprep.subr.bf16.mxu0 %v1111
    %1467 = vmatpush1.bf16.msra.mxu0 %v1110
    %1468 = vmatprep.subr.bf16.mxu0 %v1114
    %1469 = vmatpush1.bf16.msra.mxu0 %v1113
    %1470 = vmatprep.mubr.bf16.mxu0 %v321
    %1471 = vmatmul.mubr.bf16.gmra.mrb[0].mxu0 %v320
    %v1472 = vpop.f32.mrb[0].mxu0
    %v1473 = vadd.f32 %v1432, %v1472
    %v1474 = vpop.f32.mrb[0].mxu0
    %v1475 = vadd.f32 %v1434, %v1474
    %v1476 = vpop.f32.mrb[0].mxu0
    %v1477 = vpop.f32.mrb[0].mxu0
    %1478 = vdwg.mxu0
    %1479 = vmatprep.subr.bf16.mxu0 %v1117
    %1480 = vmatpush1.bf16.msra.mxu0 %v1116
    %1481 = vmatprep.subr.bf16.mxu0 %v1120
    %1482 = vmatpush1.bf16.msra.mxu0 %v1119
    %1483 = vmatprep.subr.bf16.mxu0 %v1123
    %1484 = vmatpush1.bf16.msra.mxu0 %v1122
    %1485 = vmatprep.subr.bf16.mxu0 %v1126
    %1486 = vmatpush1.bf16.msra.mxu0 %v1125
    %1487 = vmatprep.subr.bf16.mxu0 %v1129
    %1488 = vmatpush1.bf16.msra.mxu0 %v1128
    %1489 = vmatprep.subr.bf16.mxu0 %v1132
    %1490 = vmatpush1.bf16.msra.mxu0 %v1131
    %1491 = vmatprep.subr.bf16.mxu0 %v1135
    %1492 = vmatpush1.bf16.msra.mxu0 %v1134
    %1493 = vmatprep.subr.bf16.mxu0 %v1138
    %1494 = vmatpush1.bf16.msra.mxu0 %v1137
    %1495 = vmatprep.subr.bf16.mxu0 %v1141
    %1496 = vmatpush1.bf16.msra.mxu0 %v1140
    %1497 = vmatprep.subr.bf16.mxu0 %v1144
    %1498 = vmatpush1.bf16.msra.mxu0 %v1143
    %1499 = vmatprep.subr.bf16.mxu0 %v1147
    %1500 = vmatpush1.bf16.msra.mxu0 %v1146
    %1501 = vmatprep.subr.bf16.mxu0 %v1150
    %1502 = vmatpush1.bf16.msra.mxu0 %v1149
    %1503 = vmatprep.subr.bf16.mxu0 %v1153
    %1504 = vmatpush1.bf16.msra.mxu0 %v1152
    %1505 = vmatprep.subr.bf16.mxu0 %v1156
    %1506 = vmatpush1.bf16.msra.mxu0 %v1155
    %1507 = vmatprep.subr.bf16.mxu0 %v1159
    %1508 = vmatpush1.bf16.msra.mxu0 %v1158
    %1509 = vmatprep.subr.bf16.mxu0 %v1162
    %1510 = vmatpush1.bf16.msra.mxu0 %v1161
    %1511 = vmatprep.mubr.bf16.mxu0 %v323
    %1512 = vmatmul.mubr.bf16.gmra.mrb[0].mxu0 %v322
    %v1513 = vpop.f32.mrb[0].mxu0
    %v1514 = vadd.f32 %v1473, %v1513
    %v1515 = vpop.f32.mrb[0].mxu0
    %v1516 = vadd.f32 %v1475, %v1515
    %v1517 = vpop.f32.mrb[0].mxu0
    %v1518 = vpop.f32.mrb[0].mxu0
    %1519 = vdwg.mxu0
    %1520 = vmatprep.subr.bf16.mxu0 0
    %1521 = vmatpush1.bf16.msra.mxu0 %v974
    %1522 = vmatprep.subr.bf16.mxu0 0
    %1523 = vmatpush1.bf16.msra.mxu0 %v977
    %1524 = vmatprep.subr.bf16.mxu0 0
    %1525 = vmatpush1.bf16.msra.mxu0 %v980
    %1526 = vmatprep.subr.bf16.mxu0 0
    %1527 = vmatpush1.bf16.msra.mxu0 %v983
    %1528 = vmatprep.subr.bf16.mxu0 0
    %1529 = vmatpush1.bf16.msra.mxu0 %v986
    %1530 = vmatprep.subr.bf16.mxu0 0
    %1531 = vmatpush1.bf16.msra.mxu0 %v989
    %1532 = vmatprep.subr.bf16.mxu0 0
    %1533 = vmatpush1.bf16.msra.mxu0 %v992
    %1534 = vmatprep.subr.bf16.mxu0 0
    %1535 = vmatpush1.bf16.msra.mxu0 %v995
    %1536 = vmatprep.subr.bf16.mxu0 0
    %1537 = vmatpush1.bf16.msra.mxu0 %v998
    %1538 = vmatprep.subr.bf16.mxu0 0
    %1539 = vmatpush1.bf16.msra.mxu0 %v1001
    %1540 = vmatprep.subr.bf16.mxu0 0
    %1541 = vmatpush1.bf16.msra.mxu0 %v1004
    %1542 = vmatprep.subr.bf16.mxu0 0
    %1543 = vmatpush1.bf16.msra.mxu0 %v1007
    %1544 = vmatprep.subr.bf16.mxu0 0
    %1545 = vmatpush1.bf16.msra.mxu0 %v1010
    %1546 = vmatprep.subr.bf16.mxu0 0
    %1547 = vmatpush1.bf16.msra.mxu0 %v1013
    %1548 = vmatprep.subr.bf16.mxu0 0
    %1549 = vmatpush1.bf16.msra.mxu0 %v1016
    %1550 = vmatprep.subr.bf16.mxu0 0
    %1551 = vmatpush1.bf16.msra.mxu0 %v1019
    %1552 = vmatprep.mubr.bf16.mxu0 %v317
    %1553 = vmatmul.mubr.bf16.gmra.mrb[0].mxu0 %v316
    %v1554 = vpop.f32.mrb[0].mxu0
    %v1555 = vadd.f32 0.0, %v1554
    %v1556 = vpop.f32.mrb[0].mxu0
    %v1557 = vpop.f32.mrb[0].mxu0
    %v1558 = vpop.f32.mrb[0].mxu0
    %1559 = vdwg.mxu0
    %1560 = vmatprep.subr.bf16.mxu0 0
    %1561 = vmatpush1.bf16.msra.mxu0 %v1022
    %1562 = vmatprep.subr.bf16.mxu0 0
    %1563 = vmatpush1.bf16.msra.mxu0 %v1025
    %1564 = vmatprep.subr.bf16.mxu0 0
    %1565 = vmatpush1.bf16.msra.mxu0 %v1028
    %1566 = vmatprep.subr.bf16.mxu0 0
    %1567 = vmatpush1.bf16.msra.mxu0 %v1031
    %1568 = vmatprep.subr.bf16.mxu0 0
    %1569 = vmatpush1.bf16.msra.mxu0 %v1034
    %1570 = vmatprep.subr.bf16.mxu0 0
    %1571 = vmatpush1.bf16.msra.mxu0 %v1037
    %1572 = vmatprep.subr.bf16.mxu0 0
    %1573 = vmatpush1.bf16.msra.mxu0 %v1040
    %1574 = vmatprep.subr.bf16.mxu0 0
    %1575 = vmatpush1.bf16.msra.mxu0 %v1043
    %1576 = vmatprep.subr.bf16.mxu0 0
    %1577 = vmatpush1.bf16.msra.mxu0 %v1046
    %1578 = vmatprep.subr.bf16.mxu0 0
    %1579 = vmatpush1.bf16.msra.mxu0 %v1049
    %1580 = vmatprep.subr.bf16.mxu0 0
    %1581 = vmatpush1.bf16.msra.mxu0 %v1052
    %1582 = vmatprep.subr.bf16.mxu0 0
    %1583 = vmatpush1.bf16.msra.mxu0 %v1055
    %1584 = vmatprep.subr.bf16.mxu0 0
    %1585 = vmatpush1.bf16.msra.mxu0 %v1058
    %1586 = vmatprep.subr.bf16.mxu0 0
    %1587 = vmatpush1.bf16.msra.mxu0 %v1061
    %1588 = vmatprep.subr.bf16.mxu0 0
    %1589 = vmatpush1.bf16.msra.mxu0 %v1064
    %1590 = vmatprep.subr.bf16.mxu0 0
    %1591 = vmatpush1.bf16.msra.mxu0 %v1067
    %1592 = vmatprep.mubr.bf16.mxu0 %v319
    %1593 = vmatmul.mubr.bf16.gmra.mrb[0].mxu0 %v318
    %v1594 = vpop.f32.mrb[0].mxu0
    %v1595 = vadd.f32 %v1555, %v1594
    %v1596 = vpop.f32.mrb[0].mxu0
    %v1597 = vpop.f32.mrb[0].mxu0
    %v1598 = vpop.f32.mrb[0].mxu0
    %1599 = vdwg.mxu0
    %1600 = vmatprep.subr.bf16.mxu0 0
    %1601 = vmatpush1.bf16.msra.mxu0 %v1070
    %1602 = vmatprep.subr.bf16.mxu0 0
    %1603 = vmatpush1.bf16.msra.mxu0 %v1073
    %1604 = vmatprep.subr.bf16.mxu0 0
    %1605 = vmatpush1.bf16.msra.mxu0 %v1076
    %1606 = vmatprep.subr.bf16.mxu0 0
    %1607 = vmatpush1.bf16.msra.mxu0 %v1079
    %1608 = vmatprep.subr.bf16.mxu0 0
    %1609 = vmatpush1.bf16.msra.mxu0 %v1082
    %1610 = vmatprep.subr.bf16.mxu0 0
    %1611 = vmatpush1.bf16.msra.mxu0 %v1085
    %1612 = vmatprep.subr.bf16.mxu0 0
    %1613 = vmatpush1.bf16.msra.mxu0 %v1088
    %1614 = vmatprep.subr.bf16.mxu0 0
    %1615 = vmatpush1.bf16.msra.mxu0 %v1091
    %1616 = vmatprep.subr.bf16.mxu0 0
    %1617 = vmatpush1.bf16.msra.mxu0 %v1094
    %1618 = vmatprep.subr.bf16.mxu0 0
    %1619 = vmatpush1.bf16.msra.mxu0 %v1097
    %1620 = vmatprep.subr.bf16.mxu0 0
    %1621 = vmatpush1.bf16.msra.mxu0 %v1100
    %1622 = vmatprep.subr.bf16.mxu0 0
    %1623 = vmatpush1.bf16.msra.mxu0 %v1103
    %1624 = vmatprep.subr.bf16.mxu0 0
    %1625 = vmatpush1.bf16.msra.mxu0 %v1106
    %1626 = vmatprep.subr.bf16.mxu0 0
    %1627 = vmatpush1.bf16.msra.mxu0 %v1109
    %1628 = vmatprep.subr.bf16.mxu0 0
    %1629 = vmatpush1.bf16.msra.mxu0 %v1112
    %1630 = vmatprep.subr.bf16.mxu0 0
    %1631 = vmatpush1.bf16.msra.mxu0 %v1115
    %1632 = vmatprep.mubr.bf16.mxu0 %v321
    %1633 = vmatmul.mubr.bf16.gmra.mrb[0].mxu0 %v320
    %v1634 = vpop.f32.mrb[0].mxu0
    %v1635 = vadd.f32 %v1595, %v1634
    %v1636 = vpop.f32.mrb[0].mxu0
    %v1637 = vpop.f32.mrb[0].mxu0
    %v1638 = vpop.f32.mrb[0].mxu0
    %1639 = vdwg.mxu0
    %1640 = vmatprep.subr.bf16.mxu0 0
    %1641 = vmatpush1.bf16.msra.mxu0 %v1118
    %1642 = vmatprep.subr.bf16.mxu0 0
    %1643 = vmatpush1.bf16.msra.mxu0 %v1121
    %1644 = vmatprep.subr.bf16.mxu0 0
    %1645 = vmatpush1.bf16.msra.mxu0 %v1124
    %1646 = vmatprep.subr.bf16.mxu0 0
    %1647 = vmatpush1.bf16.msra.mxu0 %v1127
    %1648 = vmatprep.subr.bf16.mxu0 0
    %1649 = vmatpush1.bf16.msra.mxu0 %v1130
    %1650 = vmatprep.subr.bf16.mxu0 0
    %1651 = vmatpush1.bf16.msra.mxu0 %v1133
    %1652 = vmatprep.subr.bf16.mxu0 0
    %1653 = vmatpush1.bf16.msra.mxu0 %v1136
    %1654 = vmatprep.subr.bf16.mxu0 0
    %1655 = vmatpush1.bf16.msra.mxu0 %v1139
    %1656 = vmatprep.subr.bf16.mxu0 0
    %1657 = vmatpush1.bf16.msra.mxu0 %v1142
    %1658 = vmatprep.subr.bf16.mxu0 0
    %1659 = vmatpush1.bf16.msra.mxu0 %v1145
    %1660 = vmatprep.subr.bf16.mxu0 0
    %1661 = vmatpush1.bf16.msra.mxu0 %v1148
    %1662 = vmatprep.subr.bf16.mxu0 0
    %1663 = vmatpush1.bf16.msra.mxu0 %v1151
    %1664 = vmatprep.subr.bf16.mxu0 0
    %1665 = vmatpush1.bf16.msra.mxu0 %v1154
    %1666 = vmatprep.subr.bf16.mxu0 0
    %1667 = vmatpush1.bf16.msra.mxu0 %v1157
    %1668 = vmatprep.subr.bf16.mxu0 0
    %1669 = vmatpush1.bf16.msra.mxu0 %v1160
    %1670 = vmatprep.subr.bf16.mxu0 0
    %1671 = vmatpush1.bf16.msra.mxu0 %v1163
    %1672 = vmatprep.mubr.bf16.mxu0 %v323
    %1673 = vmatmul.mubr.bf16.gmra.mrb[0].mxu0 %v322
    %v1674 = vpop.f32.mrb[0].mxu0
    %v1675 = vadd.f32 %v1635, %v1674
    %v1676 = vpop.f32.mrb[0].mxu0
    %v1677 = vpop.f32.mrb[0].mxu0
    %v1678 = vpop.f32.mrb[0].mxu0
    %1679 = vdwg.mxu0
    %v1680 = vadd.f32 %v45, %v1514
    %v1681 = vadd.f32 %v46, %v1516
    %v1682 = vadd.f32 %v47, %v1675
    %1683 = vst [vmem:[#allocation2] sm:$0xff] %v1680
    %1684 = vst [vmem:[#allocation2 + $0x8] sm:$0xff] %v1681
    %1685 = vst [vmem:[#allocation2 + $0x10] sm:$0xff] %v1682
    // Predicated region
    $region22: #{my_layers_pallas.1} parent=1 // pred_check
      %p1686 = pneg %p29
    $region23: #{my_layers_pallas.1} parent=1 // pred_check_branch
      %1688 = sbr.rel (%p1686) target = $region25
    $region24: #{my_layers_pallas.1} parent=1 // pred_region
      %v1689 = vld [vmem:[#allocation2] sm:$0xff]
      %v1690 = vld [vmem:[#allocation2 + $0x8] sm:$0xff]
      %v1691 = vld [vmem:[#allocation2 + $0x10] sm:$0xff]
      %v1692 = vld [vmem:[%s2] sm:$0x7]
      %v1694 = vlaneseq
      %v1695 = vshrl.u32 %v1694, 7
      %v1696 = vsub.s32 0, %v1695
      %v1697 = vrot.slane %v1692, %v1696
      %v1698 = vlaneseq
      %v1699 = vshrl.u32 %v1698, 7
      %v1700 = vsub.s32 1, %v1699
      %v1701 = vrot.slane %v1692, %v1700
      %v1702 = vlaneseq
      %v1703 = vshrl.u32 %v1702, 7
      %v1704 = vsub.s32 2, %v1703
      %v1705 = vrot.slane %v1692, %v1704
      %v1709 = vadd.f32 %v1689, %v1697
      %v1710 = vadd.f32 %v1690, %v1701
      %v1711 = vadd.f32 %v1691, %v1705
      %1712 = vst [vmem:[%s3] sm:$0xff] %v1709
      %1713 = vst [vmem:[%s3 + $0x8] sm:$0xff] %v1710
      %1714 = vst [vmem:[%s3 + $0x10] sm:$0xff] %v1711
    $region25: #{my_layers_pallas.1} parent=1 // pred_fallthru
      _
    // Predicated region
    $region26: #{my_layers_pallas.1} parent=1 // pred_check
      _
    $region27: #{my_layers_pallas.1} parent=1 // pred_check_branch
      %1716 = sbr.rel (0) target = $region29
    $region28: #{my_layers_pallas.1} parent=1 // pred_region
      _
    $region29: #{my_layers_pallas.1} parent=1 // pred_fallthru
      _
    // Predicated region
    $region30: #{my_layers_pallas.1} parent=1 // pred_check
      _
    $region31: #{my_layers_pallas.1} parent=1 // pred_check_branch
      %1718 = sbr.rel (0) target = $region33
    $region32: #{my_layers_pallas.1} parent=1 // pred_region
      _
    $region33: #{my_layers_pallas.1} parent=1 // pred_fallthru
      _
    %1719 = vsyncpa [#allocation4], 1

</llo_original>
